<compile_context>
chip_gen: v7x
topology: tpu7x:2x2x1
jax: 0.10.0
libtpu: 0.0.40
codegen_flags: <defaults>
</compile_context>

<pallas_src>
from functools import partial

import jax
import jax.numpy as jnp
from jax.experimental import pallas as pl
from jax.experimental.pallas import tpu as pltpu


def _round_up(x, m):
    return ((x + m - 1) // m) * m


# ----------------------------------------------------------------------------
# Kernel: fused global-average-pool + linear.
#   x_ref : [tile_n, C, HW]  activations in native NCHW layout (spatial flat)
#   w_ref : [C, NCp]         linear weight transposed, classes zero-padded
#   b_ref : [1, NCp]         bias, zero padded
#   o_ref : [tile_n, NCp]    logits (padded class columns sliced off outside)
# ----------------------------------------------------------------------------
def decoder_kernel(x_ref, w_ref, b_ref, o_ref, *, inv_hw, n_valid, tile_n,
                   mask_rows):
    # Global average pool: reduce the spatial (lane) axis, scale by 1/HW.
    pooled = jnp.sum(x_ref[...], axis=-1) * inv_hw              # [tile_n, C]

    if mask_rows:
        # Ragged last batch tile: zero rows past the real batch so stale VMEM
        # never feeds the MXU.  (Their output rows are OOB and discarded.)
        row = (pl.program_id(0) * tile_n
               + jax.lax.broadcasted_iota(jnp.int32, (tile_n, 1), 0))
        pooled = jnp.where(row < n_valid, pooled, 0.0)

    # TODO(synk): on v7x (3.2 TB/s HBM) the lane-axis reduce above can make the
    # XLU the binding slot; if so, switch the HW sum to an MXU ones-vector dot.
    o_ref[...] = (jnp.dot(pooled, w_ref[...],
                          preferred_element_type=jnp.float32) + b_ref[...])


# ----------------------------------------------------------------------------
# Tile sizing: biggest batch tile whose (double-buffered) blocks fit the VMEM
# budget, with the resident weight/bias accounted for.  Multiple of 8 unless a
# single tile covers the whole batch (then block dim == array dim is legal).
# ----------------------------------------------------------------------------
def _choose_tile_n(n, c, hw, ncp, block_budget_bytes):
    per_row = 2 * (c * hw * 4) + 2 * (ncp * 4)      # x block + out block (x2 buf)
    fixed = 2 * (c * ncp * 4) + 2 * (8 * ncp * 4)   # weight + bias (x2 buf)
    avail = block_budget_bytes - fixed
    tile = max(avail // per_row, 8)
    tile = min(tile, 512)                           # diminishing returns past this
    tile = (tile // 8) * 8
    if tile >= n:
        return n                                    # one block covers the batch
    return int(tile)


# ----------------------------------------------------------------------------
# Wrapper.
# ----------------------------------------------------------------------------
def resnet_decoder_forward(x_nchw, weight, bias, *,
                           block_vmem_budget=36 * 1024 * 1024,
                           vmem_limit_bytes=48 * 1024 * 1024):
    """x_nchw: [N, C, H, W]; weight: [n_classes, C]; bias: [n_classes]."""
    n, c, h, w_sp = x_nchw.shape
    n_classes = weight.shape[0]
    hw = h * w_sp

    # Native layout, contiguous reshape only -- no extra HBM traffic.
    x = x_nchw.reshape(n, c, hw)

    # Pad only the tiny weight/bias so the output's last dim is lane-dense.
    ncp = _round_up(n_classes, 128)
    w_p = jnp.pad(jnp.transpose(weight, (1, 0)), ((0, 0), (0, ncp - n_classes)))
    b_p = jnp.pad(bias, (0, ncp - n_classes)).reshape(1, ncp)

    tile_n = _choose_tile_n(n, c, hw, ncp, block_vmem_budget)
    grid = (pl.cdiv(n, tile_n),)
    mask_rows = (n % tile_n) != 0

    out = pl.pallas_call(
        partial(decoder_kernel, inv_hw=1.0 / float(hw), n_valid=n,
                tile_n=tile_n, mask_rows=mask_rows),
        out_shape=jax.ShapeDtypeStruct((n, ncp), jnp.float32),
        grid=grid,
        in_specs=[
            pl.BlockSpec((tile_n, c, hw), lambda i: (i, 0, 0)),  # batch-tiled x
            pl.BlockSpec((c, ncp), lambda i: (0, 0)),            # weight (resident)
            pl.BlockSpec((1, ncp), lambda i: (0, 0)),            # bias   (resident)
        ],
        out_specs=pl.BlockSpec((tile_n, ncp), lambda i: (i, 0)),
        compiler_params=pltpu.CompilerParams(
            dimension_semantics=("parallel",),        # v7x: split tiles over 2 TCs
            vmem_limit_bytes=vmem_limit_bytes),
    )(x, w_p, b_p)

    return out[:, :n_classes]


# ----------------------------------------------------------------------------
if __name__ == "__main__":
    key = jax.random.PRNGKey(0)
    kx, kw, kb = jax.random.split(key, 3)

    # Small shapes consistent with the module: the decoder maps a feature map
    # [N, in_features, H, W] to n_classes logits.
    N, C, H, W = 2, 32, 8, 8
    n_classes = 10

    x = jax.random.normal(kx, (N, C, H, W), jnp.float32)
    bound = 1.0 / (C ** 0.5)  # PyTorch nn.Linear default init range
    weight = jax.random.uniform(kw, (n_classes, C), jnp.float32, -bound, bound)
    bias = jax.random.uniform(kb, (n_classes,), jnp.float32, -bound, bound)

    fwd = jax.jit(lambda inp: resnet_decoder_forward(inp, weight, bias))
    out = jax.block_until_ready(fwd(x))

    # Pure-JAX reference: AdaptiveAvgPool2d((1,1)) -> flatten -> Linear.
    ref = jnp.mean(x, axis=(2, 3)) @ weight.T + bias

    assert out.shape == (N, n_classes), out.shape
    assert out.dtype == jnp.float32
    assert bool(jnp.all(jnp.isfinite(out)))
    assert bool(jnp.allclose(out, ref, atol=1e-5, rtol=1e-5)), \
        float(jnp.max(jnp.abs(out - ref)))
    print("KERNEL_OK")
</pallas_src>

<mosaic_0001>
module attributes {stable_mosaic.version = 11 : i64} {
  func.func @decoder_kernel(%arg0: i32, %arg1: memref<2x32x64xf32, #tpu.memory_space<vmem>>, %arg2: memref<32x128xf32, #tpu.memory_space<vmem>>, %arg3: memref<1x128xf32, #tpu.memory_space<vmem>>, %arg4: memref<2x128xf32, #tpu.memory_space<vmem>>) attributes {dimension_semantics = [#tpu.dimension_semantics<parallel>], iteration_bounds = array<i64: 1>, scalar_prefetch = 0 : i64, scratch_operands = 0 : i64, tpu.core_type = #tpu.core_type<tc>, window_params = [{transform_indices = @transform_0, window_bounds = array<i64: 2, 32, 64>}, {pipeline_mode = #tpu.pipeline_mode<synchronous>, transform_indices = @transform_1, window_bounds = array<i64: 32, 128>}, {pipeline_mode = #tpu.pipeline_mode<synchronous>, transform_indices = @transform_2, window_bounds = array<i64: 1, 128>}, {transform_indices = @transform_3, window_bounds = array<i64: 2, 128>}]} {
    %c0 = arith.constant 0 : index
    %c0_0 = arith.constant 0 : index
    %c0_1 = arith.constant 0 : index
    %0 = vector.load %arg1[%c0, %c0_0, %c0_1] : memref<2x32x64xf32, #tpu.memory_space<vmem>>, vector<2x32x64xf32>
    %cst = arith.constant dense<0.000000e+00> : vector<2x32xf32>
    %1 = vector.multi_reduction <add>, %0, %cst [2] : vector<2x32x64xf32> to vector<2x32xf32>
    %cst_2 = arith.constant 1.562500e-02 : f32
    %2 = vector.broadcast %cst_2 : f32 to vector<2x32xf32>
    %3 = arith.mulf %1, %2 : vector<2x32xf32>
    %c0_3 = arith.constant 0 : index
    %c0_4 = arith.constant 0 : index
    %4 = vector.load %arg2[%c0_3, %c0_4] : memref<32x128xf32, #tpu.memory_space<vmem>>, vector<32x128xf32>
    %cst_5 = arith.constant dense<0.000000e+00> : vector<2x128xf32>
    %5 = tpu.matmul %3, %4, %cst_5 {dimension_numbers = #tpu.dot_dimension_numbers<[1], [0], [0], [1], [0, 0, 1, 1], [], []>} : vector<2x32xf32>, vector<32x128xf32>, vector<2x128xf32> -> vector<2x128xf32>
    %c0_6 = arith.constant 0 : index
    %c0_7 = arith.constant 0 : index
    %6 = vector.load %arg3[%c0_6, %c0_7] : memref<1x128xf32, #tpu.memory_space<vmem>>, vector<1x128xf32>
    %7 = vector.broadcast %6 : vector<1x128xf32> to vector<2x128xf32>
    %8 = arith.addf %5, %7 : vector<2x128xf32>
    %c0_8 = arith.constant 0 : index
    %c0_9 = arith.constant 0 : index
    %9 = vector.load %arg4[%c0_8, %c0_9] : memref<2x128xf32, #tpu.memory_space<vmem>>, vector<2x128xf32>
    tpu.vector_store %arg4[%c0_8, %c0_9], %8 {strides = array<i32>} : memref<2x128xf32, #tpu.memory_space<vmem>>, vector<2x128xf32>,
    return
  }
  func.func @transform_0(%arg0: i32) -> (i32, i32, i32) {
    %c0_i32 = arith.constant 0 : i32
    %c0_i32_0 = arith.constant 0 : i32
    %c0_i32_1 = arith.constant 0 : i32
    return %arg0, %c0_i32, %c0_i32_0 : i32, i32, i32
  }
  func.func @transform_1(%arg0: i32) -> (i32, i32) {
    %c0_i32 = arith.constant 0 : i32
    %c0_i32_0 = arith.constant 0 : i32
    %c0_i32_1 = arith.constant 0 : i32
    return %c0_i32, %c0_i32_0 : i32, i32
  }
  func.func @transform_2(%arg0: i32) -> (i32, i32) {
    %c0_i32 = arith.constant 0 : i32
    %c0_i32_0 = arith.constant 0 : i32
    %c0_i32_1 = arith.constant 0 : i32
    return %c0_i32, %c0_i32_0 : i32, i32
  }
  func.func @transform_3(%arg0: i32) -> (i32, i32) {
    %c0_i32 = arith.constant 0 : i32
    %c0_i32_0 = arith.constant 0 : i32
    return %arg0, %c0_i32 : i32, i32
  }
}

</mosaic_0001>

<llo_original>
// kernel: _lambda_.1
$region0: #{_lambda_.1}
  #allocation0 [shape = 'u32[]', space=smem, size = 0x4, offset = 0x4, fixed_abs, tag = 'smem constant byte address 0x4 - core index']
  #allocation1 [shape = 'u32[144,128]{1,0:T(1,128)}', space=vmem, size = 0x12000, scoped, tag = 'internal scratch']
  %s0 = inlined_call_operand.vmem [shape: f32[2,32,64], index: 0, kind: input, shape index: {}]
  %s1 = inlined_call_operand.vmem [shape: f32[32,128], index: 1, kind: input, shape index: {}]
  %s2 = inlined_call_operand.vmem [shape: f32[1,128], index: 2, kind: input, shape index: {}]
  %s3 = inlined_call_operand.hbm [shape: f32[2,128], index: 3, kind: output, shape index: {}]
  %s4 = sld [smem:[#allocation0]]
  $region22: #{_lambda_.1} parent=0
    _
  %s6 = ssub.s32 1, %s4
  %s7 = scalar_select 0, %s6, %s4
  $region1: #{_lambda_.1} parent=0
    #allocation2 [shape = 'u8[1024]{0}', space=vmem, size = 0x400, scoped, tag = 'output window, operand 0, single buffered']
    #allocation3 [shape = 's32[1]{0}', space=sflag, size = 0x4, scoped, tag = 'scoped memory for _lambda_.1']
    %8 = vsyncpa [#allocation3], 0
    // Predicated region
    $region2: #{_lambda_.1} parent=1 // pred_check
      _
    $region3: #{_lambda_.1} parent=1 // pred_check_branch
      %10 = sbr.rel (0) target = $region5
    $region4: #{_lambda_.1} parent=1 // pred_region
      _
    $region5: #{_lambda_.1} parent=1 // pred_fallthru
      _
    // Predicated region
    $region6: #{_lambda_.1} parent=1 // pred_check
      _
    $region7: #{_lambda_.1} parent=1 // pred_check_branch
      %12 = sbr.rel (0) target = $region9
    $region8: #{_lambda_.1} parent=1 // pred_region
      _
    $region9: #{_lambda_.1} parent=1 // pred_fallthru
      _
    // Predicated region
    $region10: #{_lambda_.1} parent=1 // pred_check
      _
    $region11: #{_lambda_.1} parent=1 // pred_check_branch
      %14 = sbr.rel (0) target = $region13
    $region12: #{_lambda_.1} parent=1 // pred_region
      _
    $region13: #{_lambda_.1} parent=1 // pred_fallthru
      _
    %v15 = vld [vmem:[%s0] sm:$0xff]
    %v16 = vld [vmem:[%s0 + $0x8] sm:$0xff]
    %v17 = vld [vmem:[%s0 + $0x10] sm:$0xff]
    %v18 = vld [vmem:[%s0 + $0x18] sm:$0xff]
    %v19 = vld [vmem:[%s0 + $0x20] sm:$0xff]
    %v20 = vld [vmem:[%s0 + $0x28] sm:$0xff]
    %v21 = vld [vmem:[%s0 + $0x30] sm:$0xff]
    %v22 = vld [vmem:[%s0 + $0x38] sm:$0xff]
    %vm23 = vcmask 523264
    %v24 = vsel %vm23, %v15, 0.0
    %25 = vadd.xlane.f32.xlu0 %v24
    %v26 = vpop.xlane.xlu0 %25
    %v27 = vsel %vm23, %v16, 0.0
    %28 = vadd.xlane.f32.xlu0 %v27
    %v29 = vpop.xlane.xlu0 %28
    %v30 = vsel %vm23, %v17, 0.0
    %31 = vadd.xlane.f32.xlu0 %v30
    %v32 = vpop.xlane.xlu0 %31
    %v33 = vsel %vm23, %v18, 0.0
    %34 = vadd.xlane.f32.xlu0 %v33
    %v35 = vpop.xlane.xlu0 %34
    %v36 = vsel %vm23, %v19, 0.0
    %37 = vadd.xlane.f32.xlu0 %v36
    %v38 = vpop.xlane.xlu0 %37
    %v39 = vsel %vm23, %v20, 0.0
    %40 = vadd.xlane.f32.xlu0 %v39
    %v41 = vpop.xlane.xlu0 %40
    %v42 = vsel %vm23, %v21, 0.0
    %43 = vadd.xlane.f32.xlu0 %v42
    %v44 = vpop.xlane.xlu0 %43
    %v45 = vsel %vm23, %v22, 0.0
    %46 = vadd.xlane.f32.xlu0 %v45
    %v47 = vpop.xlane.xlu0 %46
    %v48 = vmul.f32 %v26, 0.015625
    %v49 = vmul.f32 %v29, 0.015625
    %v50 = vmul.f32 %v32, 0.015625
    %v51 = vmul.f32 %v35, 0.015625
    %v52 = vmul.f32 %v38, 0.015625
    %v53 = vmul.f32 %v41, 0.015625
    %v54 = vmul.f32 %v44, 0.015625
    %v55 = vmul.f32 %v47, 0.015625
    %v56 = vld [vmem:[%s1] sm:$0xff]
    %v57 = vld [vmem:[%s1 + $0x8] sm:$0xff]
    %v58 = vld [vmem:[%s1 + $0x10] sm:$0xff]
    %v59 = vld [vmem:[%s1 + $0x18] sm:$0xff]
    %v60 = vld [vmem:[%s2] sm:$0x1]
    %v62 = vlaneseq
    %v63 = vshrl.u32 %v62, 7
    %v64 = vsub.s32 0, %v63
    %v65 = vrot.slane %v60, %v64
    %v75 = vlaneseq
    %v76 = vand.u32 %v75, 127
    %v77 = vlaneseq
    %v78 = vshrl.u32 %v77, 7
    %v79 = vsub.s32 %v76, %v78
    %v80 = vrot.slane %v48, %v79
    %v81 = vadd.s32 %v76, 4294967288
    %v82 = vlaneseq
    %v83 = vshrl.u32 %v82, 7
    %v84 = vsub.s32 %v81, %v83
    %v85 = vrot.slane %v49, %v84
    %vm86 = vcmask 130112
    %v87 = vsel %vm86, %v85, %v80
    %v88 = vadd.s32 %v76, 4294967280
    %v89 = vlaneseq
    %v90 = vshrl.u32 %v89, 7
    %v91 = vsub.s32 %v88, %v90
    %v92 = vrot.slane %v50, %v91
    %vm93 = vcmask 195712
    %v94 = vsel %vm93, %v92, %v87
    %v95 = vadd.s32 %v76, 4294967272
    %v96 = vlaneseq
    %v97 = vshrl.u32 %v96, 7
    %v98 = vsub.s32 %v95, %v97
    %v99 = vrot.slane %v51, %v98
    %vm100 = vcmask 261312
    %v101 = vsel %vm100, %v99, %v94
    %v102 = vlaneseq
    %v103 = vshrl.u32 %v102, 7
    %v104 = vsub.s32 %v76, %v103
    %v105 = vrot.slane %v52, %v104
    %v106 = vlaneseq
    %v107 = vshrl.u32 %v106, 7
    %v108 = vsub.s32 %v81, %v107
    %v109 = vrot.slane %v53, %v108
    %v110 = vsel %vm86, %v109, %v105
    %v111 = vlaneseq
    %v112 = vshrl.u32 %v111, 7
    %v113 = vsub.s32 %v88, %v112
    %v114 = vrot.slane %v54, %v113
    %v115 = vsel %vm93, %v114, %v110
    %v116 = vlaneseq
    %v117 = vshrl.u32 %v116, 7
    %v118 = vsub.s32 %v95, %v117
    %v119 = vrot.slane %v55, %v118
    %v120 = vsel %vm100, %v119, %v115
    %vm121 = vcmask 1041409
    %v122 = vsel %vm121, %v120, %v101
    %vm123 = vcmask 261120
    %v124 = vsel %vm123, %v122, 0
    %126 = vmatprep.subr.mxu0 0.0
    %127 = vmatpush1.msra.mxu0 %v56
    %128 = vmatprep.subr.mxu0 0.0
    %129 = vmatpush1.msra.mxu0 %v57
    %130 = vmatprep.subr.mxu0 0.0
    %131 = vmatpush1.msra.mxu0 %v58
    %132 = vmatprep.subr.mxu0 0.0
    %133 = vmatpush1.msra.mxu0 %v59
    %134 = vmatprep.subr.mxu0 0.0
    %135 = vmatpush1.msra.mxu0 0.0
    %136 = vmatprep.subr.mxu0 0.0
    %137 = vmatpush1.msra.mxu0 0.0
    %138 = vmatprep.subr.mxu0 0.0
    %139 = vmatpush1.msra.mxu0 0.0
    %140 = vmatprep.subr.mxu0 0.0
    %141 = vmatpush1.msra.mxu0 0.0
    %142 = vmatprep.subr.mxu0 0.0
    %143 = vmatpush1.msra.mxu0 0.0
    %144 = vmatprep.subr.mxu0 0.0
    %145 = vmatpush1.msra.mxu0 0.0
    %146 = vmatprep.subr.mxu0 0.0
    %147 = vmatpush1.msra.mxu0 0.0
    %148 = vmatprep.subr.mxu0 0.0
    %149 = vmatpush1.msra.mxu0 0.0
    %150 = vmatprep.subr.mxu0 0.0
    %151 = vmatpush1.msra.mxu0 0.0
    %152 = vmatprep.subr.mxu0 0.0
    %153 = vmatpush1.msra.mxu0 0.0
    %154 = vmatprep.subr.mxu0 0.0
    %155 = vmatpush1.msra.mxu0 0.0
    %156 = vmatprep.subr.mxu0 0.0
    %157 = vmatpush1.msra.mxu0 0.0
    %158 = vmatprep.subr.mxu0 0.0
    %159 = vmatpush1.msra.mxu0 0.0
    %160 = vmatprep.subr.mxu0 0.0
    %161 = vmatpush1.msra.mxu0 0.0
    %162 = vmatprep.subr.mxu0 0.0
    %163 = vmatpush1.msra.mxu0 0.0
    %164 = vmatprep.subr.mxu0 0.0
    %165 = vmatpush1.msra.mxu0 0.0
    %166 = vmatprep.subr.mxu0 0.0
    %167 = vmatpush1.msra.mxu0 0.0
    %168 = vmatprep.subr.mxu0 0.0
    %169 = vmatpush1.msra.mxu0 0.0
    %170 = vmatprep.subr.mxu0 0.0
    %171 = vmatpush1.msra.mxu0 0.0
    %172 = vmatprep.subr.mxu0 0.0
    %173 = vmatpush1.msra.mxu0 0.0
    %174 = vmatprep.subr.mxu0 0.0
    %175 = vmatpush1.msra.mxu0 0.0
    %176 = vmatprep.subr.mxu0 0.0
    %177 = vmatpush1.msra.mxu0 0.0
    %178 = vmatprep.subr.mxu0 0.0
    %179 = vmatpush1.msra.mxu0 0.0
    %180 = vmatprep.subr.mxu0 0.0
    %181 = vmatpush1.msra.mxu0 0.0
    %182 = vmatprep.subr.mxu0 0.0
    %183 = vmatpush1.msra.mxu0 0.0
    %184 = vmatprep.subr.mxu0 0.0
    %185 = vmatpush1.msra.mxu0 0.0
    %186 = vmatprep.subr.mxu0 0.0
    %187 = vmatpush1.msra.mxu0 0.0
    %188 = vmatprep.subr.mxu0 0.0
    %189 = vmatpush1.msra.mxu0 0.0
    %190 = vmatprep.mubr.f32.mxu0 0.0
    %191 = vmatmul.mubr.f32.gmra.mrb[0].mxu0 %v124
    %v192 = vpop.f32.mrb[0].mxu0
    %v193 = vadd.f32 %v65, %v192
    %v194 = vpop.f32.mrb[0].mxu0
    %195 = vdwg.mxu0
    %196 = vst [vmem:[#allocation2] sm:$0x3] %v193
    // Predicated region
    $region14: #{_lambda_.1} parent=1 // pred_check
      _
    $region15: #{_lambda_.1} parent=1 // pred_check_branch
      %198 = sbr.rel (0) target = $region17
    $region16: #{_lambda_.1} parent=1 // pred_region
      %s200 = ssub.s32 32, 32
      %201 = vsyncadd [#allocation3], %s200
      %s203 = sshll.u32 [#allocation2], 4
      %s204 = int_to_ptr.vmem [resolvable:$true] %s203
      %206 = dma.vmem_to_hbm [thread:$0]  %s204, 32, %s3, [#allocation3]
    $region17: #{_lambda_.1} parent=1 // pred_fallthru
      _
    // Predicated region
    $region18: #{_lambda_.1} parent=1 // pred_check
      _
    $region19: #{_lambda_.1} parent=1 // pred_check_branch
      %208 = sbr.rel (0) target = $region21
    $region20: #{_lambda_.1} parent=1 // pred_region
      %209 = dma.done [#allocation3], 32
    $region21: #{_lambda_.1} parent=1 // pred_fallthru
      _
    %210 = vsyncpa [#allocation3], 1

</llo_original>
